<compile_context>
chip_gen: v6e
topology: v6e:2x2x1
jax: 0.10.0
libtpu: 0.0.40
codegen_flags: <defaults>
</compile_context>

<pallas_src>
import functools

import jax
import jax.numpy as jnp
from jax import lax
from jax.experimental import pallas as pl
from jax.experimental.pallas import tpu as pltpu


def _sublane_pack(itemsize):
    # sublane packing: 8 rows for 32-bit, 16 for 16-bit, 32 for 8-bit dtypes
    return {4: 8, 2: 16, 1: 32}.get(itemsize, 8)


def _round_down(x, m):
    return (x // m) * m


def _vmem_capacity_bytes():
    try:
        return int(pltpu.get_tpu_info().vmem_capacity_bytes)
    except Exception:
        return 64 * 1024 * 1024  # conservative fallback (v7x per-TC size)


def _choose_tiles(B, L, C, in_itemsize, acc_itemsize, out_itemsize, budget_bytes):
    """Pick (Bt, Lt) so double-buffered tiles + accumulator fit the VMEM budget."""
    in_pack = _sublane_pack(in_itemsize)
    out_pack = _sublane_pack(out_itemsize)

    def bytes_needed(bt, lt):
        return (2 * bt * lt * C * in_itemsize     # double-buffered input tile
                + bt * C * acc_itemsize           # accumulator scratch
                + 2 * bt * C * out_itemsize)      # double-buffered output tile

    # Batch tile: full B when small (full-dim block => no sublane constraint),
    # otherwise a sublane-dense multiple of the output packing.
    bt = B if B <= out_pack else out_pack

    if bytes_needed(bt, L) <= budget_bytes:
        lt = L
        # Whole sequence fits per step: grow the batch tile to amortize the
        # ~0.35us per-grid-step overhead, but keep >= 2 batch blocks when B is
        # large so the parallel axis can shard across TensorCores.
        if B > bt:
            per_row = 2 * L * C * in_itemsize + C * acc_itemsize + 2 * C * out_itemsize
            max_fit = max(_round_down(budget_bytes // per_row, out_pack), out_pack)
            target = min(_round_down(-(-B // 2), out_pack), max_fit)
            bt = max(bt, target)
    else:
        # Tile the L (reduction) axis; Lt must be a multiple of the input packing.
        fixed = bt * C * acc_itemsize + 2 * bt * C * out_itemsize
        avail = max(budget_bytes - fixed, 0)
        lt = _round_down(avail // (2 * bt * C * in_itemsize), in_pack)
        lt = min(max(lt, in_pack), L)  # last resort for huge C; vmem_limit covers it

    return bt, lt, bytes_needed(bt, lt)


def _pool_kernel(x_ref, o_ref, *scratch, method, seq_len, l_tile, inv_len,
                 fold_k, out_c, acc_dtype, neutral, single_step):
    # x_ref: (Bt, Lt, C_in) input tile, o_ref: (Bt, out_c) output tile,
    # scratch (when present): (Bt, C_in) accumulator persisting across the L axis.

    def reduce_tile(x):
        if method == "avgpool":
            return jnp.sum(x, axis=1)
        return jnp.max(x, axis=1)

    def combine_folds(v):
        # (Bt, fold_k*out_c) -> (Bt, out_c): combine lane-folded groups.
        if fold_k == 1:
            return v
        op = jnp.add if method == "avgpool" else jnp.maximum
        out = v[:, 0:out_c]
        for i in range(1, fold_k):
            out = op(out, v[:, i * out_c:(i + 1) * out_c])
        return out

    def finalize(v):
        v = combine_folds(v)
        if method == "avgpool":
            v = v * inv_len
        return v.astype(o_ref.dtype)

    if single_step:
        # Whole (folded) L fits in one step: no scratch round-trip, no init.
        o_ref[...] = finalize(reduce_tile(x_ref[...].astype(acc_dtype)))
        return

    (acc_ref,) = scratch
    l = pl.program_id(1)
    n_l = pl.num_programs(1)

    @pl.when(l == 0)
    def _init():
        acc_ref[...] = jnp.full(acc_ref.shape, neutral, acc_ref.dtype)

    def accumulate(x):
        if method == "avgpool":
            acc_ref[...] += reduce_tile(x)
        else:
            acc_ref[...] = jnp.maximum(acc_ref[...], reduce_tile(x))

    ragged = (seq_len % l_tile) != 0
    if not ragged:
        accumulate(x_ref[...].astype(acc_dtype))
    else:
        # Only the final grid step pays the mask cost (iota + where); every other
        # step runs the plain accumulate so the kernel stays at the HBM roofline.
        @pl.when(l < n_l - 1)
        def _plain():
            accumulate(x_ref[...].astype(acc_dtype))

        @pl.when(l == n_l - 1)
        def _masked():
            x = x_ref[...].astype(acc_dtype)
            pos = l * l_tile + lax.broadcasted_iota(jnp.int32, x.shape, 1)
            x = jnp.where(pos < seq_len, x, jnp.asarray(neutral, acc_dtype))
            accumulate(x)

    @pl.when(l == n_l - 1)
    def _finalize():
        o_ref[...] = finalize(acc_ref[...])


def pool(x, method="avgpool", *, tile_budget_bytes=None):
    """x: (B, L, C) -> (B, C), reducing over L (mean or max)."""
    if method not in ("avgpool", "maxpool"):
        raise NotImplementedError(f"Pooling method {method} not implemented")

    B, L, C = x.shape
    out_dtype = x.dtype

    # Accumulator dtype / neutral element.
    if method == "avgpool":
        acc_dtype = jnp.float32
        neutral = 0.0
    else:
        acc_dtype = x.dtype
        if jnp.issubdtype(x.dtype, jnp.floating):
            neutral = -jnp.inf
        else:
            neutral = int(jnp.iinfo(x.dtype).min)

    # Lane folding for small C: make the minor dim lane-dense (128 wide).
    fold_k = 1
    if C < 128 and C >= 8 and 128 % C == 0:
        k = 128 // C
        if L % k == 0:
            fold_k = k
    C_in = C * fold_k
    L_in = L // fold_k
    x_in = x.reshape(B, L_in, C_in) if fold_k > 1 else x

    # Generation-aware VMEM budgeting.
    vmem_cap = _vmem_capacity_bytes()
    vmem_cap_limit = (3 * vmem_cap) // 4          # headroom for Mosaic scratch
    if tile_budget_bytes is None:
        tile_budget_bytes = min(24 * 1024 * 1024, vmem_cap // 4)
    tile_budget_bytes = min(tile_budget_bytes, (2 * vmem_cap_limit) // 3)

    bt, lt, tile_bytes = _choose_tiles(
        B, L_in, C_in, x.dtype.itemsize, jnp.dtype(acc_dtype).itemsize,
        jnp.dtype(out_dtype).itemsize, tile_budget_bytes)

    n_l = pl.cdiv(L_in, lt)
    single_step = (n_l == 1)
    grid = (pl.cdiv(B, bt), n_l)  # reduction (L) axis last

    vmem_limit = min(vmem_cap_limit, max(32 * 1024 * 1024, 2 * tile_bytes))
    # Never request less than the tiles need (huge-C fallback) nor more than physical.
    vmem_limit = int(min(max(vmem_limit, tile_bytes + (2 << 20)), vmem_cap))

    kernel = functools.partial(
        _pool_kernel, method=method, seq_len=L_in, l_tile=lt, inv_len=1.0 / L,
        fold_k=fold_k, out_c=C, acc_dtype=acc_dtype, neutral=neutral,
        single_step=single_step)

    scratch_shapes = [] if single_step else [pltpu.VMEM((bt, C_in), acc_dtype)]

    return pl.pallas_call(
        kernel,
        out_shape=jax.ShapeDtypeStruct((B, C), out_dtype),
        grid_spec=pltpu.PrefetchScalarGridSpec(
            num_scalar_prefetch=0,
            grid=grid,
            in_specs=[pl.BlockSpec((bt, lt, C_in), lambda b, l: (b, l, 0))],
            out_specs=pl.BlockSpec((bt, C), lambda b, l: (b, 0)),
            scratch_shapes=scratch_shapes,
        ),
        compiler_params=pltpu.CompilerParams(
            dimension_semantics=("parallel", "arbitrary"),
            vmem_limit_bytes=vmem_limit,
        ),
    )(x_in)


if __name__ == "__main__":
    key = jax.random.PRNGKey(0)

    # Small shapes consistent with the module: (batch, seq, hidden).
    B, L, C = 2, 8, 32
    x = jax.random.normal(key, (B, L, C), dtype=jnp.float32)

    out_avg = jax.block_until_ready(pool(x, method="avgpool"))
    ref_avg = jnp.mean(x, axis=1)
    assert out_avg.shape == (B, C)
    assert jnp.allclose(out_avg, ref_avg, atol=1e-5, rtol=1e-5)

    out_max = jax.block_until_ready(pool(x, method="maxpool"))
    ref_max = jnp.max(x, axis=1)
    assert out_max.shape == (B, C)
    assert jnp.allclose(out_max, ref_max, atol=1e-5, rtol=1e-5)

    # Exercise the tiled / gated-mask L-reduction path (bf16, ragged L) by
    # forcing a small per-step VMEM tile budget.
    key2 = jax.random.PRNGKey(1)
    B2, L2, C2 = 4, 100, 256
    x2 = jax.random.normal(key2, (B2, L2, C2), dtype=jnp.bfloat16)

    out_avg2 = jax.block_until_ready(
        pool(x2, method="avgpool", tile_budget_bytes=256 * 1024))
    ref_avg2 = jnp.mean(x2.astype(jnp.float32), axis=1)
    assert jnp.allclose(out_avg2.astype(jnp.float32), ref_avg2, atol=2e-2, rtol=2e-2)

    out_max2 = jax.block_until_ready(
        pool(x2, method="maxpool", tile_budget_bytes=256 * 1024))
    ref_max2 = jnp.max(x2, axis=1).astype(jnp.float32)
    assert jnp.allclose(out_max2.astype(jnp.float32), ref_max2, atol=1e-6, rtol=1e-6)

    # Exercise ragged batch blocks (B % bt != 0) with lane folding (C=64 -> k=2).
    key3 = jax.random.PRNGKey(2)
    B3, L3, C3 = 20, 16, 64
    x3 = jax.random.normal(key3, (B3, L3, C3), dtype=jnp.float32)

    out_avg3 = jax.block_until_ready(pool(x3, method="avgpool"))
    assert jnp.allclose(out_avg3, jnp.mean(x3, axis=1), atol=1e-5, rtol=1e-5)
    out_max3 = jax.block_until_ready(pool(x3, method="maxpool"))
    assert jnp.allclose(out_max3, jnp.max(x3, axis=1), atol=1e-6, rtol=1e-6)

    print("KERNEL_OK")
</pallas_src>

<mosaic_0001>
module attributes {stable_mosaic.version = 11 : i64} {
  func.func @_pool_kernel(%arg0: i32, %arg1: i32, %arg2: memref<2x2x128xf32, #tpu.memory_space<vmem>>, %arg3: memref<2x32xf32, #tpu.memory_space<vmem>>) attributes {dimension_semantics = [#tpu.dimension_semantics<parallel>, #tpu.dimension_semantics<arbitrary>], iteration_bounds = array<i64: 1, 1>, scalar_prefetch = 0 : i64, scratch_operands = 0 : i64, tpu.core_type = #tpu.core_type<tc>, window_params = [{transform_indices = @transform_0, window_bounds = array<i64: 2, 2, 128>}, {transform_indices = @transform_1, window_bounds = array<i64: 2, 32>}]} {
    %c0 = arith.constant 0 : index
    %c0_0 = arith.constant 0 : index
    %c0_1 = arith.constant 0 : index
    %0 = vector.load %arg2[%c0, %c0_0, %c0_1] : memref<2x2x128xf32, #tpu.memory_space<vmem>>, vector<2x2x128xf32>
    %cst = arith.constant dense<0.000000e+00> : vector<2x128xf32>
    %1 = vector.multi_reduction <add>, %0, %cst [1] : vector<2x2x128xf32> to vector<2x128xf32>
    %2 = vector.extract_strided_slice %1 {offsets = [0, 0], sizes = [2, 32], strides = [1, 1]} : vector<2x128xf32> to vector<2x32xf32>
    %3 = vector.extract_strided_slice %1 {offsets = [0, 32], sizes = [2, 32], strides = [1, 1]} : vector<2x128xf32> to vector<2x32xf32>
    %4 = arith.addf %2, %3 : vector<2x32xf32>
    %5 = vector.extract_strided_slice %1 {offsets = [0, 64], sizes = [2, 32], strides = [1, 1]} : vector<2x128xf32> to vector<2x32xf32>
    %6 = arith.addf %4, %5 : vector<2x32xf32>
    %7 = vector.extract_strided_slice %1 {offsets = [0, 96], sizes = [2, 32], strides = [1, 1]} : vector<2x128xf32> to vector<2x32xf32>
    %8 = arith.addf %6, %7 : vector<2x32xf32>
    %cst_2 = arith.constant 1.250000e-01 : f32
    %9 = vector.broadcast %cst_2 : f32 to vector<2x32xf32>
    %10 = arith.mulf %8, %9 : vector<2x32xf32>
    %c0_3 = arith.constant 0 : index
    %c0_4 = arith.constant 0 : index
    %11 = vector.load %arg3[%c0_3, %c0_4] : memref<2x32xf32, #tpu.memory_space<vmem>>, vector<2x32xf32>
    tpu.vector_store %arg3[%c0_3, %c0_4], %10 {strides = array<i32>} : memref<2x32xf32, #tpu.memory_space<vmem>>, vector<2x32xf32>,
    return
  }
  func.func @transform_0(%arg0: i32, %arg1: i32) -> (i32, i32, i32) {
    %c0_i32 = arith.constant 0 : i32
    %c0_i32_0 = arith.constant 0 : i32
    return %arg0, %arg1, %c0_i32 : i32, i32, i32
  }
  func.func @transform_1(%arg0: i32, %arg1: i32) -> (i32, i32) {
    %c0_i32 = arith.constant 0 : i32
    %c0_i32_0 = arith.constant 0 : i32
    return %arg0, %c0_i32 : i32, i32
  }
}

</mosaic_0001>

<llo_original>
// kernel: tpu_custom_call.1
$region0: #{tpu_custom_call.1}
  #allocation0 [shape = 'u32[]', space=smem, size = 0x4, offset = 0x4, fixed_abs, tag = 'smem constant byte address 0x4 - core index']
  #allocation1 [shape = 'u32[144,128]{1,0:T(1,128)}', space=vmem, size = 0x12000, scoped, tag = 'internal scratch']
  %s0 = inlined_call_operand.hbm [shape: f32[2,2,128], index: 0, kind: input, shape index: {}]
  %s1 = inlined_call_operand.hbm [shape: f32[2,32], index: 1, kind: output, shape index: {}]
  %s2 = sld [smem:[#allocation0]]
  $region18: #{tpu_custom_call.1} parent=0
    _
  %s4 = ssub.s32 1, %s2
  %s5 = scalar_select 0, %s4, %s2
  $region1: #{tpu_custom_call.1} parent=0
    #allocation2 [shape = 'u8[2048]{0}', space=vmem, size = 0x800, scoped, tag = 'input window, operand 0, single buffered']
    #allocation3 [shape = 's32[1]{0}', space=sflag, size = 0x4, scoped, tag = 'scoped memory for tpu_custom_call.1']
    #allocation4 [shape = 's32[1]{0}', space=sflag, size = 0x4, scoped, tag = 'scoped memory for tpu_custom_call.1']
    #allocation5 [shape = 'u8[1024]{0}', space=vmem, size = 0x400, scoped, tag = 'output window, operand 0, single buffered']
    %6 = vsyncpa [#allocation3], 0
    %7 = vsyncpa [#allocation4], 0
    // Predicated region
    $region2: #{tpu_custom_call.1} parent=1 // pred_check
      _
    $region3: #{tpu_custom_call.1} parent=1 // pred_check_branch
      %9 = sbr.rel (0) target = $region5
    $region4: #{tpu_custom_call.1} parent=1 // pred_region
      %s11 = ssub.s32 64, 64
      %12 = vsyncadd [#allocation3], %s11
      %s13 = sshll.u32 [#allocation2], 4
      %s14 = int_to_ptr.vmem [resolvable:$true] %s13
      %19 = dma.hbm_to_vmem [thread:$0]  %s0, 64, %s14, [#allocation3], 32, 32, 2
    $region5: #{tpu_custom_call.1} parent=1 // pred_fallthru
      _
    // Predicated region
    $region6: #{tpu_custom_call.1} parent=1 // pred_check
      _
    $region7: #{tpu_custom_call.1} parent=1 // pred_check_branch
      %21 = sbr.rel (0) target = $region9
    $region8: #{tpu_custom_call.1} parent=1 // pred_region
      %22 = dma.done [#allocation3], 64
    $region9: #{tpu_custom_call.1} parent=1 // pred_fallthru
      _
    %v23 = vld [vmem:[#allocation2] sm:$0x3]
    %v24 = vld [vmem:[#allocation2 + $0x2] sm:$0x3]
    %vm25 = vcmask 1041408
    %v26 = vsel %vm25, %v23, 0.0
    %v27 = vrot.slane %v26, 4
    %v28 = vadd.f32 %v26, %v27
    %v29 = vrot.slane %v28, 2
    %v30 = vadd.f32 %v28, %v29
    %v31 = vrot.slane %v30, 1
    %v32 = vadd.f32 %v30, %v31
    %v33 = vsel %vm25, %v24, 0.0
    %v34 = vrot.slane %v33, 4
    %v35 = vadd.f32 %v33, %v34
    %v36 = vrot.slane %v35, 2
    %v37 = vadd.f32 %v35, %v36
    %v38 = vrot.slane %v37, 1
    %v39 = vadd.f32 %v37, %v38
    %42 = vrot.lane.b32.xlu0 %v32, 96
    %v43 = vpop.permute.xlu0 %42
    %44 = vrot.lane.b32.xlu0 %v39, 96
    %v45 = vpop.permute.xlu0 %44
    %v48 = vadd.f32 %v32, %v43
    %v49 = vadd.f32 %v39, %v45
    %50 = vrot.lane.b32.xlu0 %v32, 64
    %v51 = vpop.permute.xlu0 %50
    %52 = vrot.lane.b32.xlu0 %v39, 64
    %v53 = vpop.permute.xlu0 %52
    %v56 = vadd.f32 %v48, %v51
    %v57 = vadd.f32 %v49, %v53
    %58 = vrot.lane.b32.xlu0 %v32, 32
    %v59 = vpop.permute.xlu0 %58
    %60 = vrot.lane.b32.xlu0 %v39, 32
    %v61 = vpop.permute.xlu0 %60
    %v64 = vadd.f32 %v56, %v59
    %v65 = vadd.f32 %v57, %v61
    %v66 = vmul.f32 %v64, 0.125
    %v67 = vmul.f32 %v65, 0.125
    %v70 = vrot.slane %v67, 7
    %vm71 = vcmask 1041409
    %v72 = vsel %vm71, %v70, %v66
    %vm74 = vcmask 254976
    %75 = vst.msk [vmem:[#allocation5] sm:$0x3] %vm74, %v72
    // Predicated region
    $region10: #{tpu_custom_call.1} parent=1 // pred_check
      _
    $region11: #{tpu_custom_call.1} parent=1 // pred_check_branch
      %77 = sbr.rel (0) target = $region13
    $region12: #{tpu_custom_call.1} parent=1 // pred_region
      %s79 = ssub.s32 32, 32
      %80 = vsyncadd [#allocation4], %s79
      %s82 = sshll.u32 [#allocation5], 4
      %s83 = int_to_ptr.vmem [resolvable:$true] %s82
      %85 = dma.vmem_to_hbm [thread:$0]  %s83, 32, %s1, [#allocation4]
    $region13: #{tpu_custom_call.1} parent=1 // pred_fallthru
      _
    // Predicated region
    $region14: #{tpu_custom_call.1} parent=1 // pred_check
      _
    $region15: #{tpu_custom_call.1} parent=1 // pred_check_branch
      %87 = sbr.rel (0) target = $region17
    $region16: #{tpu_custom_call.1} parent=1 // pred_region
      %88 = dma.done [#allocation4], 32
    $region17: #{tpu_custom_call.1} parent=1 // pred_fallthru
      _
    %89 = vsyncpa [#allocation3], 1
    %90 = vsyncpa [#allocation4], 1

</llo_original>
